<compile_context>
chip_gen: v5e
topology: v5e:2x2
jax: 0.10.0
libtpu: 0.0.40
codegen_flags: <defaults>
</compile_context>

<pallas_src>
import functools
import math

import jax
import jax.numpy as jnp
from jax.experimental import pallas as pl
from jax.experimental.pallas import tpu as pltpu


def make_positional_encoding(d_model: int, max_len: int = 5000,
                             dtype=jnp.float32):
    """Builds the sin/cos buffer exactly like the PyTorch module:
    pe[:, 0, 0::2] = sin(pos * div), pe[:, 0, 1::2] = cos(pos * div)."""
    position = jnp.arange(max_len, dtype=jnp.float32)[:, None]           # (L, 1)
    div_term = jnp.exp(jnp.arange(0, d_model, 2, dtype=jnp.float32)
                       * (-math.log(10000.0) / d_model))                 # (D/2,)
    angles = position * div_term                                         # (L, D/2)
    pe = jnp.zeros((max_len, d_model), dtype=jnp.float32)
    pe = pe.at[:, 0::2].set(jnp.sin(angles))
    pe = pe.at[:, 1::2].set(jnp.cos(angles))
    return pe.reshape(max_len, 1, d_model).astype(dtype)                 # (L, 1, D)


def _pos_encoding_kernel(x_ref, pe_ref, o_ref, *, batch, d_model):
    # x_ref / o_ref: (seq_tile, batch * d_model) — seq positions fill sublanes.
    # pe_ref:        (seq_tile, d_model)         — dense, one row per position.
    pe = pe_ref[...]
    if pe.dtype != o_ref.dtype:
        pe = pe.astype(o_ref.dtype)          # per-tile cast; keeps HBM in x.dtype
    for b in range(batch):                   # static unroll over lane slices
        sl = slice(b * d_model, (b + 1) * d_model)
        o_ref[:, sl] = x_ref[:, sl] + pe
    # TODO(synk): training-mode nn.Dropout(p) (stateful PRNG masking) is not
    # implemented; this is the eval()/inference forward where dropout == identity.


def _round_up(v, m):
    return ((v + m - 1) // m) * m


def _pick_seq_tile(seq_len, padded_row_bytes, target_block_bytes):
    """Largest multiple-of-8 row count near the target VMEM block size, capped
    so the grid has >= 2 steps (both v7x TensorCores busy) when seq_len allows."""
    if seq_len <= 8:
        return seq_len                                       # block == full dims
    tile = max(8, (target_block_bytes // padded_row_bytes) // 8 * 8)
    if seq_len >= 16:
        tile = min(tile, _round_up(-(-seq_len // 2), 8))     # >= 2 grid steps
    if tile >= seq_len:
        return seq_len                                       # full dim is legal
    return tile


def positional_encoding(x, pe, *, seq_tile=None, target_block_bytes=4 << 20):
    """Inference forward: out = x + pe[:seq_len].

    x:  [seq_len, batch, d_model]
    pe: [max_len, 1, d_model] (PyTorch buffer layout) or [max_len, d_model].
    """
    S, B, D = x.shape
    pe2 = pe.reshape(pe.shape[0], pe.shape[-1])      # free reshape, drops the 1
    max_len = pe2.shape[0]
    assert pe2.shape[1] == D and S <= max_len

    out_dtype = x.dtype                              # no silent f32 promotion
    elt = jnp.dtype(out_dtype).itemsize
    pe_elt = jnp.dtype(pe2.dtype).itemsize

    # Flatten (batch, d_model) into one dense lane dim (free, row-major reshape).
    x2 = x.reshape(S, B * D)

    # Padding-aware per-row VMEM bytes (lane dim padded to 128).
    x_row_bytes = _round_up(B * D, 128) * elt
    pe_row_bytes = _round_up(D, 128) * pe_elt

    if seq_tile is None:
        seq_tile = _pick_seq_tile(S, x_row_bytes, target_block_bytes)
    else:
        seq_tile = max(1, min(seq_tile, S))
        if seq_tile != S and seq_tile % 8 != 0:      # keep the (8,128) rule
            seq_tile = min(S, max(8, seq_tile - seq_tile % 8))

    grid = (pl.cdiv(S, seq_tile),)

    # Double-buffered, padded footprint: 2 x (x + out + pe) blocks.
    padded_rows = _round_up(seq_tile, 8)
    est_vmem = 2 * padded_rows * (2 * x_row_bytes + pe_row_bytes)
    vmem_limit = None
    if est_vmem > 12 * 1024 * 1024:                  # tight under v5e's 16 MiB default
        vmem_limit = min(int(est_vmem * 3 // 2), 32 * 1024 * 1024)  # v7x-safe cap

    cost = pl.CostEstimate(
        flops=S * B * D,                                       # one add / element
        transcendentals=0,
        bytes_accessed=(x.size * x.dtype.itemsize              # read x
                        + S * D * pe_elt                       # read pe[:S] once
                        + S * B * D * elt),                    # write out
    )

    kernel = functools.partial(_pos_encoding_kernel, batch=B, d_model=D)

    out2 = pl.pallas_call(
        kernel,
        out_shape=jax.ShapeDtypeStruct((S, B * D), out_dtype),
        grid_spec=pltpu.PrefetchScalarGridSpec(
            num_scalar_prefetch=0,
            grid=grid,
            in_specs=[
                pl.BlockSpec((seq_tile, B * D), lambda i: (i, 0)),
                pl.BlockSpec((seq_tile, D), lambda i: (i, 0)),
            ],
            out_specs=pl.BlockSpec((seq_tile, B * D), lambda i: (i, 0)),
        ),
        compiler_params=pltpu.CompilerParams(
            dimension_semantics=("parallel",),
            vmem_limit_bytes=vmem_limit),
        cost_estimate=cost,
    )(x2, pe2)

    return out2.reshape(S, B, D)                     # free reshape back


if __name__ == "__main__":
    # Shapes implied by forward: [seq_len, batch, d_model]. d_model=128 keeps the
    # lane dim full-width (no masked partial stores) and S=16 gives a 2-step grid.
    S, B, D = 16, 2, 128
    MAX_LEN = 5000          # module default; only pe[:S] rows are ever DMA'd.

    key = jax.random.PRNGKey(0)
    x = jax.random.normal(key, (S, B, D), dtype=jnp.float32)
    pe = make_positional_encoding(D, MAX_LEN, dtype=jnp.float32)   # (L, 1, D)

    fwd = jax.jit(positional_encoding)
    out = jax.block_until_ready(fwd(x, pe))

    # Reference (plain JAX), inference-mode forward (dropout == identity).
    ref = x + pe[:S]
    assert out.shape == (S, B, D)
    assert out.dtype == x.dtype
    assert jnp.allclose(out, ref, atol=1e-6, rtol=1e-6)

    print("KERNEL_OK")
</pallas_src>

<mosaic_0001>
module attributes {stable_mosaic.version = 11 : i64} {
  func.func @_pos_encoding_kernel(%arg0: i32, %arg1: memref<8x256xf32, #tpu.memory_space<vmem>>, %arg2: memref<8x128xf32, #tpu.memory_space<vmem>>, %arg3: memref<8x256xf32, #tpu.memory_space<vmem>>) attributes {dimension_semantics = [#tpu.dimension_semantics<parallel>], iteration_bounds = array<i64: 2>, scalar_prefetch = 0 : i64, scratch_operands = 0 : i64, tpu.core_type = #tpu.core_type<tc>, window_params = [{transform_indices = @transform_0, window_bounds = array<i64: 8, 256>}, {transform_indices = @transform_1, window_bounds = array<i64: 8, 128>}, {transform_indices = @transform_2, window_bounds = array<i64: 8, 256>}]} {
    %c0 = arith.constant 0 : index
    %c0_0 = arith.constant 0 : index
    %0 = vector.load %arg2[%c0, %c0_0] : memref<8x128xf32, #tpu.memory_space<vmem>>, vector<8x128xf32>
    %c0_1 = arith.constant 0 : index
    %c0_2 = arith.constant 0 : index
    %1 = vector.load %arg1[%c0_1, %c0_2] : memref<8x256xf32, #tpu.memory_space<vmem>>, vector<8x128xf32>
    %2 = arith.addf %1, %0 : vector<8x128xf32>
    %c0_3 = arith.constant 0 : index
    %c0_4 = arith.constant 0 : index
    %3 = vector.load %arg3[%c0_3, %c0_4] : memref<8x256xf32, #tpu.memory_space<vmem>>, vector<8x128xf32>
    tpu.vector_store %arg3[%c0_3, %c0_4], %2 {strides = array<i32>} : memref<8x256xf32, #tpu.memory_space<vmem>>, vector<8x128xf32>,
    %c0_5 = arith.constant 0 : index
    %c128 = arith.constant 128 : index
    %4 = vector.load %arg1[%c0_5, %c128] : memref<8x256xf32, #tpu.memory_space<vmem>>, vector<8x128xf32>
    %5 = arith.addf %4, %0 : vector<8x128xf32>
    %c0_6 = arith.constant 0 : index
    %c128_7 = arith.constant 128 : index
    %6 = vector.load %arg3[%c0_6, %c128_7] : memref<8x256xf32, #tpu.memory_space<vmem>>, vector<8x128xf32>
    tpu.vector_store %arg3[%c0_6, %c128_7], %5 {strides = array<i32>} : memref<8x256xf32, #tpu.memory_space<vmem>>, vector<8x128xf32>,
    return
  }
  func.func @transform_0(%arg0: i32) -> (i32, i32) {
    %c0_i32 = arith.constant 0 : i32
    %c0_i32_0 = arith.constant 0 : i32
    return %arg0, %c0_i32 : i32, i32
  }
  func.func @transform_1(%arg0: i32) -> (i32, i32) {
    %c0_i32 = arith.constant 0 : i32
    %c0_i32_0 = arith.constant 0 : i32
    return %arg0, %c0_i32 : i32, i32
  }
  func.func @transform_2(%arg0: i32) -> (i32, i32) {
    %c0_i32 = arith.constant 0 : i32
    %c0_i32_0 = arith.constant 0 : i32
    return %arg0, %c0_i32 : i32, i32
  }
}

</mosaic_0001>

<llo_original>
// kernel: positional_encoding.1
$region0: #{positional_encoding.1}
  #allocation0 [shape = 'u32[]', space=smem, size = 0x4, offset = 0x4, fixed_abs, tag = 'smem constant byte address 0x4 - core index']
  #allocation1 [shape = 'u32[72,128]{1,0:T(1,128)}', space=vmem, size = 0x9000, scoped, tag = 'internal scratch']
  %s0 = inlined_call_operand.vmem [shape: f32[16,256], index: 0, kind: input, shape index: {}]
  %s1 = inlined_call_operand.hbm [shape: f32[5000,128], index: 1, kind: input, shape index: {}]
  %s2 = inlined_call_operand.vmem [shape: f32[16,256], index: 2, kind: output, shape index: {}]
  %s3 = sld [smem:[#allocation0]]
  $region45: #{positional_encoding.1} parent=0
    _
  %s5 = ssub.s32 1, %s3
  %s6 = scalar_select 0, %s5, %s3
  $region1: #{positional_encoding.1} parent=0
    #allocation2 [shape = 'u8[8192]{0}', space=vmem, size = 0x2000, scoped, tag = 'input window, operand 1']
    #allocation3 [shape = 's32[2]{0}', space=sflag, size = 0x8, scoped, tag = 'scoped memory for positional_encoding.1']
    %7 = vsyncpa [#allocation3], 0
    %s8 = scalar_lea.sflag [#allocation3], 1
    %9 = vsyncpa %s8, 0
    loop: start=0, step=1, limit=4
    $region2: #{positional_encoding.1} parent=1 // loop_pre_header
      _
    $region3: #{positional_encoding.1} parent=1 // loop_header
      %s11 = sphi 0, %s15
      %p12 = scmp.ge.s32.totalorder %s11, 4
      %s21 = sphi 0, %s23
      %s24 = sphi 0, %s21
      %s25 = sphi 0, %s24
      %s41 = sphi 0, %s25
      %s47 = sphi 0, %s49
      %s50 = sphi 0, %s47
      %s51 = sphi 0, %s50
      %s67 = sphi 0, %s51
      %s73 = sphi 0, %s75
      %s76 = sphi 0, %s73
      %s77 = sphi 0, %s76
      %s93 = sphi 0, %s77
    $region4: #{positional_encoding.1} parent=1 // loop_header_branch
      %14 = sbr.rel (%p12) target = $region8
    $region5: #{positional_encoding.1} parent=1 // loop_body
      %s16 = ssub.s32 %s11, 1
      %s17 = ssub.s32 %s11, 2
      %s18 = sadd.s32 %s11, 1
      %s19 = ssub.s32 %s11, %s18
      %p20 = scmp.eq.s32.totalorder %s19, 0
      %s22 = sadd.s32 %s21, 1
      %s23 = scalar_select %p20, %s21, %s22
      %p26 = pneg %p20
      %p27 = scmp.eq.s32.totalorder %s11, 1
      %p28 = por %p26, %p27
      %p29 = scmp.ne.s32.totalorder %s21, %s24
      %p30 = scmp.eq.s32.totalorder %s11, 0
      %p31 = por %p29, %p30
      %p32 = scmp.ne.s32.totalorder %s21, %s24
      %p33 = scmp.eq.s32.totalorder %s16, 1
      %p34 = por %p32, %p33
      %p35 = scmp.ne.s32.totalorder %s24, %s25
      %p36 = scmp.eq.s32.totalorder %s16, 0
      %p37 = por %p35, %p36
      %p38 = scmp.ne.s32.totalorder %s24, %s25
      %p39 = scmp.eq.s32.totalorder %s17, 1
      %p40 = por %p38, %p39
      %p42 = scmp.ne.s32.totalorder %s25, %s41
      %p43 = scmp.eq.s32.totalorder %s17, 0
      %p44 = por %p42, %p43
      %s45 = ssub.s32 %s11, %s18
      %p46 = scmp.eq.s32.totalorder %s45, 0
      %s48 = sadd.s32 %s47, 1
      %s49 = scalar_select %p46, %s47, %s48
      %p52 = pneg %p46
      %p53 = scmp.eq.s32.totalorder %s11, 1
      %p54 = por %p52, %p53
      %p55 = scmp.ne.s32.totalorder %s47, %s50
      %p56 = scmp.eq.s32.totalorder %s11, 0
      %p57 = por %p55, %p56
      %p58 = scmp.ne.s32.totalorder %s47, %s50
      %p59 = scmp.eq.s32.totalorder %s16, 1
      %p60 = por %p58, %p59
      %p61 = scmp.ne.s32.totalorder %s50, %s51
      %p62 = scmp.eq.s32.totalorder %s16, 0
      %p63 = por %p61, %p62
      %p64 = scmp.ne.s32.totalorder %s50, %s51
      %p65 = scmp.eq.s32.totalorder %s17, 1
      %p66 = por %p64, %p65
      %p68 = scmp.ne.s32.totalorder %s51, %s67
      %p69 = scmp.eq.s32.totalorder %s17, 0
      %p70 = por %p68, %p69
      %s71 = ssub.s32 %s11, %s18
      %p72 = scmp.eq.s32.totalorder %s71, 0
      %s74 = sadd.s32 %s73, 1
      %s75 = scalar_select %p72, %s73, %s74
      %p78 = pneg %p72
      %p79 = scmp.eq.s32.totalorder %s11, 1
      %p80 = por %p78, %p79
      %p81 = scmp.ne.s32.totalorder %s73, %s76
      %p82 = scmp.eq.s32.totalorder %s11, 0
      %p83 = por %p81, %p82
      %p84 = scmp.ne.s32.totalorder %s73, %s76
      %p85 = scmp.eq.s32.totalorder %s16, 1
      %p86 = por %p84, %p85
      %p87 = scmp.ne.s32.totalorder %s76, %s77
      %p88 = scmp.eq.s32.totalorder %s16, 0
      %p89 = por %p87, %p88
      %p90 = scmp.ne.s32.totalorder %s76, %s77
      %p91 = scmp.eq.s32.totalorder %s17, 1
      %p92 = por %p90, %p91
      %p94 = scmp.ne.s32.totalorder %s77, %s93
      %p95 = scmp.eq.s32.totalorder %s17, 0
      %p96 = por %p94, %p95
      %p97 = scmp.le.s32.totalorder 1, %s11
      %p98 = scmp.lt.s32.totalorder %s11, 3
      %p99 = pnand %p97, %p98
      %p100 = pneg %p99
      // Predicated region
      $region9: #{positional_encoding.1} parent=5 // pred_check
        _
      $region10: #{positional_encoding.1} parent=5 // pred_check_branch
        %102 = sbr.rel (%p99) target = $region12
      $region11: #{positional_encoding.1} parent=5 // pred_region
        %s103 = ssub.s32 %s11, 1
      $region12: #{positional_encoding.1} parent=5 // pred_fallthru
        _
      %p104 = scmp.lt.s32.totalorder %s11, 2
      // Predicated region
      $region13: #{positional_encoding.1} parent=5 // pred_check
        %p105 = pneg %p104
      $region14: #{positional_encoding.1} parent=5 // pred_check_branch
        %107 = sbr.rel (%p105) target = $region16
      $region15: #{positional_encoding.1} parent=5 // pred_region
        // Predicated region
        $region17: #{positional_encoding.1} parent=15 // pred_check
          %p108 = pneg %p31
        $region18: #{positional_encoding.1} parent=15 // pred_check_branch
          %110 = sbr.rel (%p108) target = $region20
        $region19: #{positional_encoding.1} parent=15 // pred_region
          %p111 = scmp.lt.s32.totalorder %s11, 1
          %s112 = scalar_select %p111, %s11, 1
          %s113 = smul.addr %s112, 2
          %s114 = smul.addr %s113, 8
          %s115 = scalar_lea.vmem %s0, %s114
        $region20: #{positional_encoding.1} parent=15 // pred_fallthru
          _
        // Predicated region
        $region21: #{positional_encoding.1} parent=15 // pred_check
          %p116 = pneg %p57
        $region22: #{positional_encoding.1} parent=15 // pred_check_branch
          %118 = sbr.rel (%p116) target = $region24
        $region23: #{positional_encoding.1} parent=15 // pred_region
          %s119 = sand.u32 %s47, 1
          %s120 = scalar_lea.sflag [#allocation3], %s119
          %s121 = sand.u32 %s47, 1
          %s122 = smul.addr %s121, 8
          %s123 = scalar_lea.vmem [#allocation2], %s122
          %125 = vsyncadd %s120, 0
          %s126 = smul.addr %s11, 8
          %s127 = scalar_lea.hbm %s1, %s126
          %s129 = sshll.u32 %s127, 4
          %s130 = int_to_ptr.hbm [resolvable:$true] %s129
          %s131 = sshll.u32 %s123, 4
          %s132 = int_to_ptr.vmem [resolvable:$true] %s131
          %134 = dma.hbm_to_vmem [thread:$0]  %s130, 128, %s132, %s120
        $region24: #{positional_encoding.1} parent=15 // pred_fallthru
          _
      $region16: #{positional_encoding.1} parent=5 // pred_fallthru
        _
      %p135 = scmp.le.s32.totalorder 1, %s11
      %p136 = scmp.lt.s32.totalorder %s11, 3
      %p137 = pnand %p135, %p136
      %p138 = pneg %p137
      // Predicated region
      $region25: #{positional_encoding.1} parent=5 // pred_check
        _
      $region26: #{positional_encoding.1} parent=5 // pred_check_branch
        %140 = sbr.rel (%p137) target = $region28
      $region27: #{positional_encoding.1} parent=5 // pred_region
        %s141 = ssub.s32 %s11, 1
        %s142 = sand.u32 %s50, 1
        %s143 = scalar_lea.sflag [#allocation3], %s142
        %s144 = sand.u32 %s50, 1
        %s145 = smul.addr %s144, 8
        %s146 = scalar_lea.vmem [#allocation2], %s145
        // Predicated region
        $region29: #{positional_encoding.1} parent=27 // pred_check
          %p147 = pneg %p63
        $region30: #{positional_encoding.1} parent=27 // pred_check_branch
          %149 = sbr.rel (%p147) target = $region32
        $region31: #{positional_encoding.1} parent=27 // pred_region
          %151 = dma.done %s143, 128
        $region32: #{positional_encoding.1} parent=27 // pred_fallthru
          _
        %p152 = scmp.lt.s32.totalorder %s16, 1
        %s153 = scalar_select %p152, %s16, 1
        %s154 = smul.addr %s153, 2
        %s155 = smul.addr %s154, 8
        %s156 = scalar_lea.vmem %s0, %s155
        %p157 = pneg %p37
        %p158 = pneg %p34
        %s159 = sand.u32 %s50, 1
        %s160 = scalar_lea.sflag [#allocation3], %s159
        %s161 = sand.u32 %s50, 1
        %s162 = smul.addr %s161, 8
        %s163 = scalar_lea.vmem [#allocation2], %s162
        %p164 = pneg %p63
        %p165 = pneg %p60
        %p166 = pneg %p89
        %p167 = pneg %p86
        %p168 = scmp.lt.s32.totalorder %s16, 1
        %s169 = scalar_select %p168, %s16, 1
        %s170 = smul.addr %s169, 2
        %s171 = smul.addr %s170, 8
        %s172 = scalar_lea.vmem %s2, %s171
        %p173 = scmp.lt.s32.totalorder %s16, 1
        %s174 = scalar_select %p173, %s16, 1
        %s175 = smul.addr %s174, 2
        %s176 = smul.addr %s175, 8
        %s177 = scalar_lea.vmem %s0, %s176
        %p178 = scmp.lt.s32.totalorder %s16, 1
        %s179 = scalar_select %p178, %s16, 1
        %s180 = smul.addr %s179, 2
        %s181 = smul.addr %s180, 8
        %s182 = scalar_lea.vmem %s2, %s181
        %v183 = vld [vmem:[%s146] sm:$0xff]
        %v184 = vld [vmem:[%s177] sm:$0xff]
        %v185 = vadd.f32 %v184, %v183
        %186 = vst [vmem:[%s182] sm:$0xff] %v185
        %v187 = vld [vmem:[%s177 + $0x8] sm:$0xff]
        %v188 = vadd.f32 %v187, %v183
        %189 = vst [vmem:[%s182 + $0x8] sm:$0xff] %v188
        %p190 = scmp.lt.s32.totalorder %s16, 1
        %s191 = scalar_select %p190, %s16, 1
        %s192 = smul.addr %s191, 2
        %s193 = smul.addr %s192, 8
        %s194 = scalar_lea.vmem %s2, %s193
        // Predicated region
        $region33: #{positional_encoding.1} parent=27 // pred_check
          %p195 = pneg %p86
        $region34: #{positional_encoding.1} parent=27 // pred_check_branch
          %197 = sbr.rel (%p195) target = $region36
        $region35: #{positional_encoding.1} parent=27 // pred_region
          _
        $region36: #{positional_encoding.1} parent=27 // pred_fallthru
          _
      $region28: #{positional_encoding.1} parent=5 // pred_fallthru
        _
      %p198 = scmp.le.s32.totalorder 2, %s11
      // Predicated region
      $region37: #{positional_encoding.1} parent=5 // pred_check
        %p199 = pneg %p198
      $region38: #{positional_encoding.1} parent=5 // pred_check_branch
        %201 = sbr.rel (%p199) target = $region40
      $region39: #{positional_encoding.1} parent=5 // pred_region
        %s202 = ssub.s32 %s11, 2
        // Predicated region
        $region41: #{positional_encoding.1} parent=39 // pred_check
          %p203 = pneg %p92
        $region42: #{positional_encoding.1} parent=39 // pred_check_branch
          %205 = sbr.rel (%p203) target = $region44
        $region43: #{positional_encoding.1} parent=39 // pred_region
          %p206 = scmp.lt.s32.totalorder %s17, 1
          %s207 = scalar_select %p206, %s17, 1
          %s208 = smul.addr %s207, 2
          %s209 = smul.addr %s208, 8
          %s210 = scalar_lea.vmem %s2, %s209
        $region44: #{positional_encoding.1} parent=39 // pred_fallthru
          _
      $region40: #{positional_encoding.1} parent=5 // pred_fallthru
        _
    $region6: #{positional_encoding.1} parent=1 // loop_footer
      %s15 = sadd.s32 1, %s11
    $region7: #{positional_encoding.1} parent=1 // loop_footer_branch
      %10 = sbr.rel target = $region3
    $region8: #{positional_encoding.1} parent=1 // loop_exit
      _
    %211 = vsyncpa [#allocation3], 1
    %s212 = scalar_lea.sflag [#allocation3], 1
    %213 = vsyncpa %s212, 1

</llo_original>
